<compile_context>
chip_gen: v7x
topology: tpu7x:2x2x1
jax: 0.10.0
libtpu: 0.0.40
codegen_flags: <defaults>
</compile_context>

<pallas_src>
import jax
import jax.numpy as jnp
from jax import lax
from jax.experimental import pallas as pl
from jax.experimental.pallas import tpu as pltpu


# ------------------------------ Pallas kernels ------------------------------ #

def _conv_relu_pool_kernel(w_ref, p_ref, b_ref, o_ref):
    """out = relu(max_{4 pool candidates}(W @ P_i) + b), lane-dense in M.

    w_ref : (Cout, K)    bf16  conv weights (OIHW flattened)
    p_ref : (4, K, TM)   bf16  im2col patches for the 4 pooling candidates
    b_ref : (Cout, 1)    f32   bias
    o_ref : (Cout, TM)   bf16  pooled activations
    """
    w = w_ref[...]
    y0 = jnp.dot(w, p_ref[0], preferred_element_type=jnp.float32)
    y1 = jnp.dot(w, p_ref[1], preferred_element_type=jnp.float32)
    y2 = jnp.dot(w, p_ref[2], preferred_element_type=jnp.float32)
    y3 = jnp.dot(w, p_ref[3], preferred_element_type=jnp.float32)
    y = jnp.maximum(jnp.maximum(y0, y1), jnp.maximum(y2, y3))   # 2x2 max pool
    y = jnp.maximum(y + b_ref[...], 0.0)                        # bias + ReLU (f32)
    o_ref[...] = y.astype(o_ref.dtype)


def conv_relu_pool_gemm(wmat, cands, bias, *, tm=1024):
    """Fused conv+bias+ReLU+pool GEMM.  Returns (Cout, B*P*Q) bf16."""
    Cout, K = wmat.shape
    _, _, Mp = cands.shape
    b2 = bias.reshape(Cout, 1).astype(jnp.float32)
    tm = Mp if Mp <= tm else tm          # one tile at small batch, tiled when big
    grid = (pl.cdiv(Mp, tm),)
    return pl.pallas_call(
        _conv_relu_pool_kernel,
        out_shape=jax.ShapeDtypeStruct((Cout, Mp), jnp.bfloat16),
        grid=grid,
        in_specs=[
            pl.BlockSpec((Cout, K), lambda i: (0, 0)),
            pl.BlockSpec((4, K, tm), lambda i: (0, 0, i)),
            pl.BlockSpec((Cout, 1), lambda i: (0, 0)),
        ],
        out_specs=pl.BlockSpec((Cout, tm), lambda i: (0, i)),
        compiler_params=pltpu.CompilerParams(
            dimension_semantics=("parallel",)),
    )(wmat, cands, b2)


def _fc_chain_kernel(x_ref, w1_ref, b1_ref, w2_ref, b2_ref, w3_ref, b3_ref,
                     o_ref):
    """fc3(relu(fc2(relu(fc1(x))))) — all three FC layers in one body."""
    h = jnp.dot(x_ref[...], w1_ref[...], preferred_element_type=jnp.float32)
    h = jnp.maximum(h + b1_ref[...], 0.0).astype(jnp.bfloat16)
    h = jnp.dot(h, w2_ref[...], preferred_element_type=jnp.float32)
    h = jnp.maximum(h + b2_ref[...], 0.0).astype(jnp.bfloat16)
    y = jnp.dot(h, w3_ref[...], preferred_element_type=jnp.float32)
    o_ref[...] = (y + b3_ref[...]).astype(o_ref.dtype)


def fc_chain(x, w1, b1, w2, b2, w3, b3):
    B, K1 = x.shape
    N1, N2, N3 = w1.shape[1], w2.shape[1], w3.shape[1]

    def full(shape):
        return pl.BlockSpec(shape, lambda i, _s=shape: (0,) * len(_s))

    return pl.pallas_call(
        _fc_chain_kernel,
        out_shape=jax.ShapeDtypeStruct((B, N3), jnp.float32),
        grid=(1,),
        in_specs=[
            full((B, K1)),
            full((K1, N1)), full((1, N1)),
            full((N1, N2)), full((1, N2)),
            full((N2, N3)), full((1, N3)),
        ],
        out_specs=full((B, N3)),
        compiler_params=pltpu.CompilerParams(
            dimension_semantics=("arbitrary",)),
    )(x.astype(jnp.bfloat16),
      w1.astype(jnp.bfloat16), b1.reshape(1, N1).astype(jnp.float32),
      w2.astype(jnp.bfloat16), b2.reshape(1, N2).astype(jnp.float32),
      w3.astype(jnp.bfloat16), b3.reshape(1, N3).astype(jnp.float32))


# --------------------------------- JAX glue --------------------------------- #
# TODO(synk): patch extraction / layout transposes stay in XLA (one
# conv_general_dilated_patches op) rather than in-kernel shifted pl.ds gathers.

def conv_relu_pool(x_nchw, w_oihw, bias, kh=5, kw=5):
    """pool(relu(conv2d(x, w) + b)); returns channel-major (Cout, B, P, Q)."""
    B, C, H, W = x_nchw.shape
    Cout = w_oihw.shape[0]
    OH, OW = H - kh + 1, W - kw + 1
    P, Q = OH // 2, OW // 2
    K = C * kh * kw

    x_bf = x_nchw.astype(jnp.bfloat16)
    # (B, C*kh*kw, OH, OW); channel ordering (ci, ki, kj) == OIHW weight flatten.
    patches = lax.conv_general_dilated_patches(
        x_bf, (kh, kw), (1, 1), 'VALID',
        dimension_numbers=('NCHW', 'OIHW', 'NCHW'))
    # Four 2x2-pool candidates, each laid out (K, B*P*Q) so the GEMM output
    # (Cout, B*P*Q) is lane-dense in the large dim.
    cands = jnp.stack(
        [patches[:, :, di:2 * P:2, dj:2 * Q:2]
         for di in (0, 1) for dj in (0, 1)],
        axis=0)                                            # (4, B, K, P, Q)
    cands = jnp.transpose(cands, (0, 2, 1, 3, 4)).reshape(4, K, B * P * Q)

    wmat = w_oihw.reshape(Cout, K).astype(jnp.bfloat16)
    out = conv_relu_pool_gemm(wmat, cands, bias)           # (Cout, B*P*Q) bf16
    return out.reshape(Cout, B, P, Q)


# --------------------------------- Net2 model -------------------------------- #

def init_params(key, width, height):
    w = (width - 4) // 2
    h = (height - 4) // 2
    w = (w - 4) // 2
    h = (h - 4) // 2
    linear_input = 16 * int(w) * int(h)

    ks = jax.random.split(key, 10)

    def randn(k, shape, fan_in):
        return jax.random.normal(k, shape, jnp.float32) / jnp.sqrt(float(fan_in))

    params = dict(
        conv1_w=randn(ks[0], (6, 1, 5, 5), 25),
        conv1_b=randn(ks[1], (6,), 25),
        conv2_w=randn(ks[2], (16, 6, 5, 5), 150),
        conv2_b=randn(ks[3], (16,), 150),
        fc1_w=randn(ks[4], (linear_input, 120), linear_input),
        fc1_b=randn(ks[5], (120,), linear_input),
        fc2_w=randn(ks[6], (120, 84), 120),
        fc2_b=randn(ks[7], (84,), 120),
        fc3_w=randn(ks[8], (84, 10), 84),
        fc3_b=randn(ks[9], (10,), 84),
    )
    return params, linear_input


def net2_forward(params, x_nchw, linear_input):
    B = x_nchw.shape[0]
    x = conv_relu_pool(x_nchw, params['conv1_w'], params['conv1_b'])  # (6,B,14,14)
    x = jnp.transpose(x, (1, 0, 2, 3))                                # (B,6,14,14)
    x = conv_relu_pool(x, params['conv2_w'], params['conv2_b'])       # (16,B,5,5)
    # PyTorch x.view(-1, linearInput) flattens NCHW in (C, H, W) order.
    x = jnp.transpose(x, (1, 0, 2, 3)).reshape(B, linear_input)
    return fc_chain(x, params['fc1_w'], params['fc1_b'],
                    params['fc2_w'], params['fc2_b'],
                    params['fc3_w'], params['fc3_b'])


def net2_reference(params, x, linear_input):
    """Pure-JAX reference mirroring the PyTorch forward."""
    y = lax.conv_general_dilated(x, params['conv1_w'], (1, 1), 'VALID',
                                 dimension_numbers=('NCHW', 'OIHW', 'NCHW'))
    y = jnp.maximum(y + params['conv1_b'][None, :, None, None], 0.0)
    y = lax.reduce_window(y, -jnp.inf, lax.max, (1, 1, 2, 2), (1, 1, 2, 2), 'VALID')
    y = lax.conv_general_dilated(y, params['conv2_w'], (1, 1), 'VALID',
                                 dimension_numbers=('NCHW', 'OIHW', 'NCHW'))
    y = jnp.maximum(y + params['conv2_b'][None, :, None, None], 0.0)
    y = lax.reduce_window(y, -jnp.inf, lax.max, (1, 1, 2, 2), (1, 1, 2, 2), 'VALID')
    y = y.reshape(y.shape[0], linear_input)
    y = jnp.maximum(y @ params['fc1_w'] + params['fc1_b'], 0.0)
    y = jnp.maximum(y @ params['fc2_w'] + params['fc2_b'], 0.0)
    return y @ params['fc3_w'] + params['fc3_b']


# ------------------------------------ main ----------------------------------- #

if __name__ == "__main__":
    key = jax.random.PRNGKey(0)
    k_params, k_x = jax.random.split(key)

    WIDTH, HEIGHT = 32, 32                    # classic LeNet sizing -> 16*5*5
    B = 2
    params, linear_input = init_params(k_params, WIDTH, HEIGHT)
    x = jax.random.normal(k_x, (B, 1, HEIGHT, WIDTH), jnp.float32)

    # The Pallas path feeds the MXU bf16; quantize params/input to
    # bf16-representable f32 once and use them for BOTH paths so the
    # comparison isolates kernel wiring/accumulation (apples-to-apples).
    qparams = {k: v.astype(jnp.bfloat16).astype(jnp.float32)
               for k, v in params.items()}
    xq = x.astype(jnp.bfloat16).astype(jnp.float32)

    out = net2_forward(qparams, xq, linear_input)
    out = jax.block_until_ready(out)
    assert out.shape == (B, 10), out.shape

    ref = jax.block_until_ready(net2_reference(qparams, xq, linear_input))
    max_err = float(jnp.max(jnp.abs(out - ref)))
    # bf16 intermediates in the kernel vs f32 intermediates in the reference.
    assert max_err < 5e-2, f"mismatch vs reference: max abs err {max_err}"

    print("KERNEL_OK")
</pallas_src>

<mosaic_0001>
module attributes {stable_mosaic.version = 11 : i64} {
  func.func @_conv_relu_pool_kernel(%arg0: i32, %arg1: memref<6x25xbf16, #tpu.memory_space<vmem>>, %arg2: memref<4x25x392xbf16, #tpu.memory_space<vmem>>, %arg3: memref<6x1xf32, #tpu.memory_space<vmem>>, %arg4: memref<6x392xbf16, #tpu.memory_space<vmem>>) attributes {dimension_semantics = [#tpu.dimension_semantics<parallel>], iteration_bounds = array<i64: 1>, scalar_prefetch = 0 : i64, scratch_operands = 0 : i64, tpu.core_type = #tpu.core_type<tc>, window_params = [{pipeline_mode = #tpu.pipeline_mode<synchronous>, transform_indices = @transform_0, window_bounds = array<i64: 6, 25>}, {transform_indices = @transform_1, window_bounds = array<i64: 4, 25, 392>}, {pipeline_mode = #tpu.pipeline_mode<synchronous>, transform_indices = @transform_2, window_bounds = array<i64: 6, 1>}, {transform_indices = @transform_3, window_bounds = array<i64: 6, 392>}]} {
    %c0 = arith.constant 0 : index
    %c0_0 = arith.constant 0 : index
    %0 = vector.load %arg1[%c0, %c0_0] : memref<6x25xbf16, #tpu.memory_space<vmem>>, vector<6x25xbf16>
    %c0_1 = arith.constant 0 : index
    %c0_2 = arith.constant 0 : index
    %c0_3 = arith.constant 0 : index
    %1 = vector.load %arg2[%c0_1, %c0_2, %c0_3] : memref<4x25x392xbf16, #tpu.memory_space<vmem>>, vector<1x25x392xbf16>
    %2 = vector.shape_cast %1 : vector<1x25x392xbf16> to vector<25x392xbf16>
    %cst = arith.constant dense<0.000000e+00> : vector<6x392xf32>
    %3 = tpu.matmul %0, %2, %cst {dimension_numbers = #tpu.dot_dimension_numbers<[1], [0], [0], [1], [0, 0, 1, 1], [], []>} : vector<6x25xbf16>, vector<25x392xbf16>, vector<6x392xf32> -> vector<6x392xf32>
    %c1 = arith.constant 1 : index
    %c0_4 = arith.constant 0 : index
    %c0_5 = arith.constant 0 : index
    %4 = vector.load %arg2[%c1, %c0_4, %c0_5] : memref<4x25x392xbf16, #tpu.memory_space<vmem>>, vector<1x25x392xbf16>
    %5 = vector.shape_cast %4 : vector<1x25x392xbf16> to vector<25x392xbf16>
    %cst_6 = arith.constant dense<0.000000e+00> : vector<6x392xf32>
    %6 = tpu.matmul %0, %5, %cst_6 {dimension_numbers = #tpu.dot_dimension_numbers<[1], [0], [0], [1], [0, 0, 1, 1], [], []>} : vector<6x25xbf16>, vector<25x392xbf16>, vector<6x392xf32> -> vector<6x392xf32>
    %c2 = arith.constant 2 : index
    %c0_7 = arith.constant 0 : index
    %c0_8 = arith.constant 0 : index
    %7 = vector.load %arg2[%c2, %c0_7, %c0_8] : memref<4x25x392xbf16, #tpu.memory_space<vmem>>, vector<1x25x392xbf16>
    %8 = vector.shape_cast %7 : vector<1x25x392xbf16> to vector<25x392xbf16>
    %cst_9 = arith.constant dense<0.000000e+00> : vector<6x392xf32>
    %9 = tpu.matmul %0, %8, %cst_9 {dimension_numbers = #tpu.dot_dimension_numbers<[1], [0], [0], [1], [0, 0, 1, 1], [], []>} : vector<6x25xbf16>, vector<25x392xbf16>, vector<6x392xf32> -> vector<6x392xf32>
    %c3 = arith.constant 3 : index
    %c0_10 = arith.constant 0 : index
    %c0_11 = arith.constant 0 : index
    %10 = vector.load %arg2[%c3, %c0_10, %c0_11] : memref<4x25x392xbf16, #tpu.memory_space<vmem>>, vector<1x25x392xbf16>
    %11 = vector.shape_cast %10 : vector<1x25x392xbf16> to vector<25x392xbf16>
    %cst_12 = arith.constant dense<0.000000e+00> : vector<6x392xf32>
    %12 = tpu.matmul %0, %11, %cst_12 {dimension_numbers = #tpu.dot_dimension_numbers<[1], [0], [0], [1], [0, 0, 1, 1], [], []>} : vector<6x25xbf16>, vector<25x392xbf16>, vector<6x392xf32> -> vector<6x392xf32>
    %13 = arith.maximumf %3, %6 : vector<6x392xf32>
    %14 = arith.maximumf %9, %12 : vector<6x392xf32>
    %15 = arith.maximumf %13, %14 : vector<6x392xf32>
    %c0_13 = arith.constant 0 : index
    %c0_14 = arith.constant 0 : index
    %16 = vector.load %arg3[%c0_13, %c0_14] : memref<6x1xf32, #tpu.memory_space<vmem>>, vector<6x1xf32>
    %17 = vector.broadcast %16 : vector<6x1xf32> to vector<6x392xf32>
    %18 = arith.addf %15, %17 : vector<6x392xf32>
    %cst_15 = arith.constant 0.000000e+00 : f32
    %19 = vector.broadcast %cst_15 : f32 to vector<6x392xf32>
    %20 = arith.maximumf %18, %19 : vector<6x392xf32>
    %21 = arith.truncf %20 : vector<6x392xf32> to vector<6x392xbf16>
    %c0_16 = arith.constant 0 : index
    %c0_17 = arith.constant 0 : index
    %22 = vector.load %arg4[%c0_16, %c0_17] : memref<6x392xbf16, #tpu.memory_space<vmem>>, vector<6x392xbf16>
    tpu.vector_store %arg4[%c0_16, %c0_17], %21 {strides = array<i32>} : memref<6x392xbf16, #tpu.memory_space<vmem>>, vector<6x392xbf16>,
    return
  }
  func.func @transform_0(%arg0: i32) -> (i32, i32) {
    %c0_i32 = arith.constant 0 : i32
    %c0_i32_0 = arith.constant 0 : i32
    %c0_i32_1 = arith.constant 0 : i32
    return %c0_i32, %c0_i32_0 : i32, i32
  }
  func.func @transform_1(%arg0: i32) -> (i32, i32, i32) {
    %c0_i32 = arith.constant 0 : i32
    %c0_i32_0 = arith.constant 0 : i32
    %c0_i32_1 = arith.constant 0 : i32
    return %c0_i32, %c0_i32_0, %arg0 : i32, i32, i32
  }
  func.func @transform_2(%arg0: i32) -> (i32, i32) {
    %c0_i32 = arith.constant 0 : i32
    %c0_i32_0 = arith.constant 0 : i32
    %c0_i32_1 = arith.constant 0 : i32
    return %c0_i32, %c0_i32_0 : i32, i32
  }
  func.func @transform_3(%arg0: i32) -> (i32, i32) {
    %c0_i32 = arith.constant 0 : i32
    %c0_i32_0 = arith.constant 0 : i32
    return %c0_i32, %arg0 : i32, i32
  }
}

</mosaic_0001>

<llo_original>
// kernel: tpu_custom_call.1
$region0: #{tpu_custom_call.1}
  #allocation0 [shape = 'u32[]', space=smem, size = 0x4, offset = 0x4, fixed_abs, tag = 'smem constant byte address 0x4 - core index']
  #allocation1 [shape = 'u32[144,128]{1,0:T(1,128)}', space=vmem, size = 0x12000, scoped, tag = 'internal scratch']
  %s0 = inlined_call_operand.vmem [shape: bf16[6,25], index: 0, kind: input, shape index: {}]
  %s1 = inlined_call_operand.vmem [shape: bf16[4,25,392], index: 1, kind: input, shape index: {}]
  %s2 = inlined_call_operand.vmem [shape: f32[6,1], index: 2, kind: input, shape index: {}]
  %s3 = inlined_call_operand.hbm [shape: bf16[6,392], index: 3, kind: output, shape index: {}]
  %s4 = sld [smem:[#allocation0]]
  $region22: #{tpu_custom_call.1} parent=0
    _
  %s6 = ssub.s32 1, %s4
  %s7 = scalar_select 0, %s6, %s4
  $region1: #{tpu_custom_call.1} parent=0
    #allocation2 [shape = 'u8[8192]{0}', space=vmem, size = 0x2000, scoped, tag = 'output window, operand 0, single buffered']
    #allocation3 [shape = 's32[1]{0}', space=sflag, size = 0x4, scoped, tag = 'scoped memory for tpu_custom_call.1']
    %8 = vsyncpa [#allocation3], 0
    // Predicated region
    $region2: #{tpu_custom_call.1} parent=1 // pred_check
      _
    $region3: #{tpu_custom_call.1} parent=1 // pred_check_branch
      %10 = sbr.rel (0) target = $region5
    $region4: #{tpu_custom_call.1} parent=1 // pred_region
      _
    $region5: #{tpu_custom_call.1} parent=1 // pred_fallthru
      _
    // Predicated region
    $region6: #{tpu_custom_call.1} parent=1 // pred_check
      _
    $region7: #{tpu_custom_call.1} parent=1 // pred_check_branch
      %12 = sbr.rel (0) target = $region9
    $region8: #{tpu_custom_call.1} parent=1 // pred_region
      _
    $region9: #{tpu_custom_call.1} parent=1 // pred_fallthru
      _
    // Predicated region
    $region10: #{tpu_custom_call.1} parent=1 // pred_check
      _
    $region11: #{tpu_custom_call.1} parent=1 // pred_check_branch
      %14 = sbr.rel (0) target = $region13
    $region12: #{tpu_custom_call.1} parent=1 // pred_region
      _
    $region13: #{tpu_custom_call.1} parent=1 // pred_fallthru
      _
    %v16 = vld [vmem:[%s0] sm:$0x7]
    %v17 = vld [vmem:[%s1] sm:$0xff]
    %v18 = vld [vmem:[%s1 + $0x8] sm:$0xff]
    %v19 = vld [vmem:[%s1 + $0x10] sm:$0xff]
    %v20 = vld [vmem:[%s1 + $0x18] sm:$0xff]
    %v21 = vld [vmem:[%s1 + $0x20] sm:$0xff]
    %v22 = vld [vmem:[%s1 + $0x28] sm:$0xff]
    %v23 = vld [vmem:[%s1 + $0x30] sm:$0x11]
    %v24 = vld [vmem:[%s1 + $0x38] sm:$0x11]
    %v33 = vunpack.c.l.b16 %v17
    %v34 = vunpack.c.h.b16 %v17
    %v35 = vunpack.c.l.b16 %v18
    %v36 = vunpack.c.h.b16 %v18
    %v37 = vunpack.c.l.b16 %v19
    %v38 = vunpack.c.h.b16 %v19
    %v39 = vunpack.c.l.b16 %v20
    %v40 = vunpack.c.h.b16 %v20
    %v41 = vunpack.c.l.b16 %v21
    %v42 = vunpack.c.h.b16 %v21
    %v43 = vunpack.c.l.b16 %v22
    %v44 = vunpack.c.h.b16 %v22
    %v45 = vunpack.c.l.b16 %v23
    %v46 = vunpack.c.h.b16 %v23
    %v47 = vunpack.c.l.b16 %v24
    %v48 = vunpack.c.h.b16 %v24
    %v49 = vpack.c.b16 %v37, %v33
    %v50 = vpack.c.b16 %v38, %v34
    %v51 = vpack.c.b16 %v39, %v35
    %v52 = vpack.c.b16 %v40, %v36
    %v53 = vpack.c.b16 %v45, %v41
    %v54 = vpack.c.b16 %v46, %v42
    %v55 = vpack.c.b16 %v47, %v43
    %v56 = vpack.c.b16 %v48, %v44
    %vm61 = vcmask 203776
    %v63 = vsel %vm61, %v16, 0
    %vm65 = vcmask 1043456
    %vm66 = vcmask 1044480
    %v67 = vsel %vm65, 4294967295, 65535
    %v68 = vsel %vm66, %v67, 0
    %v70 = vand.u32 %v53, %v68
    %v73 = vand.u32 %v54, %v68
    %v76 = vand.u32 %v55, %v68
    %v79 = vand.u32 %v56, %v68
    %81 = vmatprep.subr.bf16.mxu0 %v50
    %82 = vmatpush1.bf16.msra.mxu0 %v49
    %83 = vmatprep.subr.bf16.mxu0 %v73
    %84 = vmatpush1.bf16.msra.mxu0 %v70
    %85 = vmatprep.subr.bf16.mxu0 0
    %86 = vmatpush1.bf16.msra.mxu0 0
    %87 = vmatprep.subr.bf16.mxu0 0
    %88 = vmatpush1.bf16.msra.mxu0 0
    %89 = vmatprep.subr.bf16.mxu0 0
    %90 = vmatpush1.bf16.msra.mxu0 0
    %91 = vmatprep.subr.bf16.mxu0 0
    %92 = vmatpush1.bf16.msra.mxu0 0
    %93 = vmatprep.subr.bf16.mxu0 0
    %94 = vmatpush1.bf16.msra.mxu0 0
    %95 = vmatprep.subr.bf16.mxu0 0
    %96 = vmatpush1.bf16.msra.mxu0 0
    %97 = vmatprep.subr.bf16.mxu0 0
    %98 = vmatpush1.bf16.msra.mxu0 0
    %99 = vmatprep.subr.bf16.mxu0 0
    %100 = vmatpush1.bf16.msra.mxu0 0
    %101 = vmatprep.subr.bf16.mxu0 0
    %102 = vmatpush1.bf16.msra.mxu0 0
    %103 = vmatprep.subr.bf16.mxu0 0
    %104 = vmatpush1.bf16.msra.mxu0 0
    %105 = vmatprep.subr.bf16.mxu0 0
    %106 = vmatpush1.bf16.msra.mxu0 0
    %107 = vmatprep.subr.bf16.mxu0 0
    %108 = vmatpush1.bf16.msra.mxu0 0
    %109 = vmatprep.subr.bf16.mxu0 0
    %110 = vmatpush1.bf16.msra.mxu0 0
    %111 = vmatprep.subr.bf16.mxu0 0
    %112 = vmatpush1.bf16.msra.mxu0 0
    %113 = vmatprep.mubr.bf16.mxu0 0
    %114 = vmatmul.mubr.bf16.gmra.mrb[0].mxu0 %v63
    %v115 = vpop.f32.mrb[0].mxu0
    %v116 = vadd.f32 0.0, %v115
    %v117 = vpop.f32.mrb[0].mxu0
    %v118 = vadd.f32 0.0, %v117
    %v119 = vpop.f32.mrb[0].mxu0
    %v120 = vpop.f32.mrb[0].mxu0
    %121 = vdwg.mxu0
    %122 = vmatprep.subr.bf16.mxu0 %v52
    %123 = vmatpush1.bf16.msra.mxu0 %v51
    %124 = vmatprep.subr.bf16.mxu0 %v79
    %125 = vmatpush1.bf16.msra.mxu0 %v76
    %126 = vmatprep.subr.bf16.mxu0 0
    %127 = vmatpush1.bf16.msra.mxu0 0
    %128 = vmatprep.subr.bf16.mxu0 0
    %129 = vmatpush1.bf16.msra.mxu0 0
    %130 = vmatprep.subr.bf16.mxu0 0
    %131 = vmatpush1.bf16.msra.mxu0 0
    %132 = vmatprep.subr.bf16.mxu0 0
    %133 = vmatpush1.bf16.msra.mxu0 0
    %134 = vmatprep.subr.bf16.mxu0 0
    %135 = vmatpush1.bf16.msra.mxu0 0
    %136 = vmatprep.subr.bf16.mxu0 0
    %137 = vmatpush1.bf16.msra.mxu0 0
    %138 = vmatprep.subr.bf16.mxu0 0
    %139 = vmatpush1.bf16.msra.mxu0 0
    %140 = vmatprep.subr.bf16.mxu0 0
    %141 = vmatpush1.bf16.msra.mxu0 0
    %142 = vmatprep.subr.bf16.mxu0 0
    %143 = vmatpush1.bf16.msra.mxu0 0
    %144 = vmatprep.subr.bf16.mxu0 0
    %145 = vmatpush1.bf16.msra.mxu0 0
    %146 = vmatprep.subr.bf16.mxu0 0
    %147 = vmatpush1.bf16.msra.mxu0 0
    %148 = vmatprep.subr.bf16.mxu0 0
    %149 = vmatpush1.bf16.msra.mxu0 0
    %150 = vmatprep.subr.bf16.mxu0 0
    %151 = vmatpush1.bf16.msra.mxu0 0
    %152 = vmatprep.subr.bf16.mxu0 0
    %153 = vmatpush1.bf16.msra.mxu0 0
    %154 = vmatprep.mubr.bf16.mxu0 0
    %155 = vmatmul.mubr.bf16.gmra.mrb[0].mxu0 %v63
    %v156 = vpop.f32.mrb[0].mxu0
    %v157 = vadd.f32 0.0, %v156
    %v158 = vpop.f32.mrb[0].mxu0
    %v159 = vadd.f32 0.0, %v158
    %v160 = vpop.f32.mrb[0].mxu0
    %v161 = vpop.f32.mrb[0].mxu0
    %162 = vdwg.mxu0
    %s163 = scalar_lea.vmem %s1, 64
    %v164 = vld [vmem:[%s163] sm:$0xff]
    %v165 = vld [vmem:[%s163 + $0x8] sm:$0xff]
    %v166 = vld [vmem:[%s163 + $0x10] sm:$0xff]
    %v167 = vld [vmem:[%s163 + $0x18] sm:$0xff]
    %v168 = vld [vmem:[%s163 + $0x20] sm:$0xff]
    %v169 = vld [vmem:[%s163 + $0x28] sm:$0xff]
    %v170 = vld [vmem:[%s163 + $0x30] sm:$0x11]
    %v171 = vld [vmem:[%s163 + $0x38] sm:$0x11]
    %v180 = vunpack.c.l.b16 %v164
    %v181 = vunpack.c.h.b16 %v164
    %v182 = vunpack.c.l.b16 %v165
    %v183 = vunpack.c.h.b16 %v165
    %v184 = vunpack.c.l.b16 %v166
    %v185 = vunpack.c.h.b16 %v166
    %v186 = vunpack.c.l.b16 %v167
    %v187 = vunpack.c.h.b16 %v167
    %v188 = vunpack.c.l.b16 %v168
    %v189 = vunpack.c.h.b16 %v168
    %v190 = vunpack.c.l.b16 %v169
    %v191 = vunpack.c.h.b16 %v169
    %v192 = vunpack.c.l.b16 %v170
    %v193 = vunpack.c.h.b16 %v170
    %v194 = vunpack.c.l.b16 %v171
    %v195 = vunpack.c.h.b16 %v171
    %v196 = vpack.c.b16 %v184, %v180
    %v197 = vpack.c.b16 %v185, %v181
    %v198 = vpack.c.b16 %v186, %v182
    %v199 = vpack.c.b16 %v187, %v183
    %v200 = vpack.c.b16 %v192, %v188
    %v201 = vpack.c.b16 %v193, %v189
    %v202 = vpack.c.b16 %v194, %v190
    %v203 = vpack.c.b16 %v195, %v191
    %v209 = vand.u32 %v200, %v68
    %v212 = vand.u32 %v201, %v68
    %v215 = vand.u32 %v202, %v68
    %v218 = vand.u32 %v203, %v68
    %220 = vmatprep.subr.bf16.mxu0 %v197
    %221 = vmatpush1.bf16.msra.mxu0 %v196
    %222 = vmatprep.subr.bf16.mxu0 %v212
    %223 = vmatpush1.bf16.msra.mxu0 %v209
    %224 = vmatprep.subr.bf16.mxu0 0
    %225 = vmatpush1.bf16.msra.mxu0 0
    %226 = vmatprep.subr.bf16.mxu0 0
    %227 = vmatpush1.bf16.msra.mxu0 0
    %228 = vmatprep.subr.bf16.mxu0 0
    %229 = vmatpush1.bf16.msra.mxu0 0
    %230 = vmatprep.subr.bf16.mxu0 0
    %231 = vmatpush1.bf16.msra.mxu0 0
    %232 = vmatprep.subr.bf16.mxu0 0
    %233 = vmatpush1.bf16.msra.mxu0 0
    %234 = vmatprep.subr.bf16.mxu0 0
    %235 = vmatpush1.bf16.msra.mxu0 0
    %236 = vmatprep.subr.bf16.mxu0 0
    %237 = vmatpush1.bf16.msra.mxu0 0
    %238 = vmatprep.subr.bf16.mxu0 0
    %239 = vmatpush1.bf16.msra.mxu0 0
    %240 = vmatprep.subr.bf16.mxu0 0
    %241 = vmatpush1.bf16.msra.mxu0 0
    %242 = vmatprep.subr.bf16.mxu0 0
    %243 = vmatpush1.bf16.msra.mxu0 0
    %244 = vmatprep.subr.bf16.mxu0 0
    %245 = vmatpush1.bf16.msra.mxu0 0
    %246 = vmatprep.subr.bf16.mxu0 0
    %247 = vmatpush1.bf16.msra.mxu0 0
    %248 = vmatprep.subr.bf16.mxu0 0
    %249 = vmatpush1.bf16.msra.mxu0 0
    %250 = vmatprep.subr.bf16.mxu0 0
    %251 = vmatpush1.bf16.msra.mxu0 0
    %252 = vmatprep.mubr.bf16.mxu0 0
    %253 = vmatmul.mubr.bf16.gmra.mrb[0].mxu0 %v63
    %v254 = vpop.f32.mrb[0].mxu0
    %v255 = vadd.f32 0.0, %v254
    %v256 = vpop.f32.mrb[0].mxu0
    %v257 = vadd.f32 0.0, %v256
    %v258 = vpop.f32.mrb[0].mxu0
    %v259 = vpop.f32.mrb[0].mxu0
    %260 = vdwg.mxu0
    %261 = vmatprep.subr.bf16.mxu0 %v199
    %262 = vmatpush1.bf16.msra.mxu0 %v198
    %263 = vmatprep.subr.bf16.mxu0 %v218
    %264 = vmatpush1.bf16.msra.mxu0 %v215
    %265 = vmatprep.subr.bf16.mxu0 0
    %266 = vmatpush1.bf16.msra.mxu0 0
    %267 = vmatprep.subr.bf16.mxu0 0
    %268 = vmatpush1.bf16.msra.mxu0 0
    %269 = vmatprep.subr.bf16.mxu0 0
    %270 = vmatpush1.bf16.msra.mxu0 0
    %271 = vmatprep.subr.bf16.mxu0 0
    %272 = vmatpush1.bf16.msra.mxu0 0
    %273 = vmatprep.subr.bf16.mxu0 0
    %274 = vmatpush1.bf16.msra.mxu0 0
    %275 = vmatprep.subr.bf16.mxu0 0
    %276 = vmatpush1.bf16.msra.mxu0 0
    %277 = vmatprep.subr.bf16.mxu0 0
    %278 = vmatpush1.bf16.msra.mxu0 0
    %279 = vmatprep.subr.bf16.mxu0 0
    %280 = vmatpush1.bf16.msra.mxu0 0
    %281 = vmatprep.subr.bf16.mxu0 0
    %282 = vmatpush1.bf16.msra.mxu0 0
    %283 = vmatprep.subr.bf16.mxu0 0
    %284 = vmatpush1.bf16.msra.mxu0 0
    %285 = vmatprep.subr.bf16.mxu0 0
    %286 = vmatpush1.bf16.msra.mxu0 0
    %287 = vmatprep.subr.bf16.mxu0 0
    %288 = vmatpush1.bf16.msra.mxu0 0
    %289 = vmatprep.subr.bf16.mxu0 0
    %290 = vmatpush1.bf16.msra.mxu0 0
    %291 = vmatprep.subr.bf16.mxu0 0
    %292 = vmatpush1.bf16.msra.mxu0 0
    %293 = vmatprep.mubr.bf16.mxu0 0
    %294 = vmatmul.mubr.bf16.gmra.mrb[0].mxu0 %v63
    %v295 = vpop.f32.mrb[0].mxu0
    %v296 = vadd.f32 0.0, %v295
    %v297 = vpop.f32.mrb[0].mxu0
    %v298 = vadd.f32 0.0, %v297
    %v299 = vpop.f32.mrb[0].mxu0
    %v300 = vpop.f32.mrb[0].mxu0
    %301 = vdwg.mxu0
    %s302 = scalar_lea.vmem %s1, 128
    %v303 = vld [vmem:[%s302] sm:$0xff]
    %v304 = vld [vmem:[%s302 + $0x8] sm:$0xff]
    %v305 = vld [vmem:[%s302 + $0x10] sm:$0xff]
    %v306 = vld [vmem:[%s302 + $0x18] sm:$0xff]
    %v307 = vld [vmem:[%s302 + $0x20] sm:$0xff]
    %v308 = vld [vmem:[%s302 + $0x28] sm:$0xff]
    %v309 = vld [vmem:[%s302 + $0x30] sm:$0x11]
    %v310 = vld [vmem:[%s302 + $0x38] sm:$0x11]
    %v319 = vunpack.c.l.b16 %v303
    %v320 = vunpack.c.h.b16 %v303
    %v321 = vunpack.c.l.b16 %v304
    %v322 = vunpack.c.h.b16 %v304
    %v323 = vunpack.c.l.b16 %v305
    %v324 = vunpack.c.h.b16 %v305
    %v325 = vunpack.c.l.b16 %v306
    %v326 = vunpack.c.h.b16 %v306
    %v327 = vunpack.c.l.b16 %v307
    %v328 = vunpack.c.h.b16 %v307
    %v329 = vunpack.c.l.b16 %v308
    %v330 = vunpack.c.h.b16 %v308
    %v331 = vunpack.c.l.b16 %v309
    %v332 = vunpack.c.h.b16 %v309
    %v333 = vunpack.c.l.b16 %v310
    %v334 = vunpack.c.h.b16 %v310
    %v335 = vpack.c.b16 %v323, %v319
    %v336 = vpack.c.b16 %v324, %v320
    %v337 = vpack.c.b16 %v325, %v321
    %v338 = vpack.c.b16 %v326, %v322
    %v339 = vpack.c.b16 %v331, %v327
    %v340 = vpack.c.b16 %v332, %v328
    %v341 = vpack.c.b16 %v333, %v329
    %v342 = vpack.c.b16 %v334, %v330
    %v348 = vand.u32 %v339, %v68
    %v351 = vand.u32 %v340, %v68
    %v354 = vand.u32 %v341, %v68
    %v357 = vand.u32 %v342, %v68
    %359 = vmatprep.subr.bf16.mxu0 %v336
    %360 = vmatpush1.bf16.msra.mxu0 %v335
    %361 = vmatprep.subr.bf16.mxu0 %v351
    %362 = vmatpush1.bf16.msra.mxu0 %v348
    %363 = vmatprep.subr.bf16.mxu0 0
    %364 = vmatpush1.bf16.msra.mxu0 0
    %365 = vmatprep.subr.bf16.mxu0 0
    %366 = vmatpush1.bf16.msra.mxu0 0
    %367 = vmatprep.subr.bf16.mxu0 0
    %368 = vmatpush1.bf16.msra.mxu0 0
    %369 = vmatprep.subr.bf16.mxu0 0
    %370 = vmatpush1.bf16.msra.mxu0 0
    %371 = vmatprep.subr.bf16.mxu0 0
    %372 = vmatpush1.bf16.msra.mxu0 0
    %373 = vmatprep.subr.bf16.mxu0 0
    %374 = vmatpush1.bf16.msra.mxu0 0
    %375 = vmatprep.subr.bf16.mxu0 0
    %376 = vmatpush1.bf16.msra.mxu0 0
    %377 = vmatprep.subr.bf16.mxu0 0
    %378 = vmatpush1.bf16.msra.mxu0 0
    %379 = vmatprep.subr.bf16.mxu0 0
    %380 = vmatpush1.bf16.msra.mxu0 0
    %381 = vmatprep.subr.bf16.mxu0 0
    %382 = vmatpush1.bf16.msra.mxu0 0
    %383 = vmatprep.subr.bf16.mxu0 0
    %384 = vmatpush1.bf16.msra.mxu0 0
    %385 = vmatprep.subr.bf16.mxu0 0
    %386 = vmatpush1.bf16.msra.mxu0 0
    %387 = vmatprep.subr.bf16.mxu0 0
    %388 = vmatpush1.bf16.msra.mxu0 0
    %389 = vmatprep.subr.bf16.mxu0 0
    %390 = vmatpush1.bf16.msra.mxu0 0
    %391 = vmatprep.mubr.bf16.mxu0 0
    %392 = vmatmul.mubr.bf16.gmra.mrb[0].mxu0 %v63
    %v393 = vpop.f32.mrb[0].mxu0
    %v394 = vadd.f32 0.0, %v393
    %v395 = vpop.f32.mrb[0].mxu0
    %v396 = vadd.f32 0.0, %v395
    %v397 = vpop.f32.mrb[0].mxu0
    %v398 = vpop.f32.mrb[0].mxu0
    %399 = vdwg.mxu0
    %400 = vmatprep.subr.bf16.mxu0 %v338
    %401 = vmatpush1.bf16.msra.mxu0 %v337
    %402 = vmatprep.subr.bf16.mxu0 %v357
    %403 = vmatpush1.bf16.msra.mxu0 %v354
    %404 = vmatprep.subr.bf16.mxu0 0
    %405 = vmatpush1.bf16.msra.mxu0 0
    %406 = vmatprep.subr.bf16.mxu0 0
    %407 = vmatpush1.bf16.msra.mxu0 0
    %408 = vmatprep.subr.bf16.mxu0 0
    %409 = vmatpush1.bf16.msra.mxu0 0
    %410 = vmatprep.subr.bf16.mxu0 0
    %411 = vmatpush1.bf16.msra.mxu0 0
    %412 = vmatprep.subr.bf16.mxu0 0
    %413 = vmatpush1.bf16.msra.mxu0 0
    %414 = vmatprep.subr.bf16.mxu0 0
    %415 = vmatpush1.bf16.msra.mxu0 0
    %416 = vmatprep.subr.bf16.mxu0 0
    %417 = vmatpush1.bf16.msra.mxu0 0
    %418 = vmatprep.subr.bf16.mxu0 0
    %419 = vmatpush1.bf16.msra.mxu0 0
    %420 = vmatprep.subr.bf16.mxu0 0
    %421 = vmatpush1.bf16.msra.mxu0 0
    %422 = vmatprep.subr.bf16.mxu0 0
    %423 = vmatpush1.bf16.msra.mxu0 0
    %424 = vmatprep.subr.bf16.mxu0 0
    %425 = vmatpush1.bf16.msra.mxu0 0
    %426 = vmatprep.subr.bf16.mxu0 0
    %427 = vmatpush1.bf16.msra.mxu0 0
    %428 = vmatprep.subr.bf16.mxu0 0
    %429 = vmatpush1.bf16.msra.mxu0 0
    %430 = vmatprep.subr.bf16.mxu0 0
    %431 = vmatpush1.bf16.msra.mxu0 0
    %432 = vmatprep.mubr.bf16.mxu0 0
    %433 = vmatmul.mubr.bf16.gmra.mrb[0].mxu0 %v63
    %v434 = vpop.f32.mrb[0].mxu0
    %v435 = vadd.f32 0.0, %v434
    %v436 = vpop.f32.mrb[0].mxu0
    %v437 = vadd.f32 0.0, %v436
    %v438 = vpop.f32.mrb[0].mxu0
    %v439 = vpop.f32.mrb[0].mxu0
    %440 = vdwg.mxu0
    %s441 = scalar_lea.vmem %s1, 192
    %v442 = vld [vmem:[%s441] sm:$0xff]
    %v443 = vld [vmem:[%s441 + $0x8] sm:$0xff]
    %v444 = vld [vmem:[%s441 + $0x10] sm:$0xff]
    %v445 = vld [vmem:[%s441 + $0x18] sm:$0xff]
    %v446 = vld [vmem:[%s441 + $0x20] sm:$0xff]
    %v447 = vld [vmem:[%s441 + $0x28] sm:$0xff]
    %v448 = vld [vmem:[%s441 + $0x30] sm:$0x11]
    %v449 = vld [vmem:[%s441 + $0x38] sm:$0x11]
    %v458 = vunpack.c.l.b16 %v442
    %v459 = vunpack.c.h.b16 %v442
    %v460 = vunpack.c.l.b16 %v443
    %v461 = vunpack.c.h.b16 %v443
    %v462 = vunpack.c.l.b16 %v444
    %v463 = vunpack.c.h.b16 %v444
    %v464 = vunpack.c.l.b16 %v445
    %v465 = vunpack.c.h.b16 %v445
    %v466 = vunpack.c.l.b16 %v446
    %v467 = vunpack.c.h.b16 %v446
    %v468 = vunpack.c.l.b16 %v447
    %v469 = vunpack.c.h.b16 %v447
    %v470 = vunpack.c.l.b16 %v448
    %v471 = vunpack.c.h.b16 %v448
    %v472 = vunpack.c.l.b16 %v449
    %v473 = vunpack.c.h.b16 %v449
    %v474 = vpack.c.b16 %v462, %v458
    %v475 = vpack.c.b16 %v463, %v459
    %v476 = vpack.c.b16 %v464, %v460
    %v477 = vpack.c.b16 %v465, %v461
    %v478 = vpack.c.b16 %v470, %v466
    %v479 = vpack.c.b16 %v471, %v467
    %v480 = vpack.c.b16 %v472, %v468
    %v481 = vpack.c.b16 %v473, %v469
    %v487 = vand.u32 %v478, %v68
    %v490 = vand.u32 %v479, %v68
    %v493 = vand.u32 %v480, %v68
    %v496 = vand.u32 %v481, %v68
    %498 = vmatprep.subr.bf16.mxu0 %v475
    %499 = vmatpush1.bf16.msra.mxu0 %v474
    %500 = vmatprep.subr.bf16.mxu0 %v490
    %501 = vmatpush1.bf16.msra.mxu0 %v487
    %502 = vmatprep.subr.bf16.mxu0 0
    %503 = vmatpush1.bf16.msra.mxu0 0
    %504 = vmatprep.subr.bf16.mxu0 0
    %505 = vmatpush1.bf16.msra.mxu0 0
    %506 = vmatprep.subr.bf16.mxu0 0
    %507 = vmatpush1.bf16.msra.mxu0 0
    %508 = vmatprep.subr.bf16.mxu0 0
    %509 = vmatpush1.bf16.msra.mxu0 0
    %510 = vmatprep.subr.bf16.mxu0 0
    %511 = vmatpush1.bf16.msra.mxu0 0
    %512 = vmatprep.subr.bf16.mxu0 0
    %513 = vmatpush1.bf16.msra.mxu0 0
    %514 = vmatprep.subr.bf16.mxu0 0
    %515 = vmatpush1.bf16.msra.mxu0 0
    %516 = vmatprep.subr.bf16.mxu0 0
    %517 = vmatpush1.bf16.msra.mxu0 0
    %518 = vmatprep.subr.bf16.mxu0 0
    %519 = vmatpush1.bf16.msra.mxu0 0
    %520 = vmatprep.subr.bf16.mxu0 0
    %521 = vmatpush1.bf16.msra.mxu0 0
    %522 = vmatprep.subr.bf16.mxu0 0
    %523 = vmatpush1.bf16.msra.mxu0 0
    %524 = vmatprep.subr.bf16.mxu0 0
    %525 = vmatpush1.bf16.msra.mxu0 0
    %526 = vmatprep.subr.bf16.mxu0 0
    %527 = vmatpush1.bf16.msra.mxu0 0
    %528 = vmatprep.subr.bf16.mxu0 0
    %529 = vmatpush1.bf16.msra.mxu0 0
    %530 = vmatprep.mubr.bf16.mxu0 0
    %531 = vmatmul.mubr.bf16.gmra.mrb[0].mxu0 %v63
    %v532 = vpop.f32.mrb[0].mxu0
    %v533 = vadd.f32 0.0, %v532
    %v534 = vpop.f32.mrb[0].mxu0
    %v535 = vadd.f32 0.0, %v534
    %v536 = vpop.f32.mrb[0].mxu0
    %v537 = vpop.f32.mrb[0].mxu0
    %538 = vdwg.mxu0
    %539 = vmatprep.subr.bf16.mxu0 %v477
    %540 = vmatpush1.bf16.msra.mxu0 %v476
    %541 = vmatprep.subr.bf16.mxu0 %v496
    %542 = vmatpush1.bf16.msra.mxu0 %v493
    %543 = vmatprep.subr.bf16.mxu0 0
    %544 = vmatpush1.bf16.msra.mxu0 0
    %545 = vmatprep.subr.bf16.mxu0 0
    %546 = vmatpush1.bf16.msra.mxu0 0
    %547 = vmatprep.subr.bf16.mxu0 0
    %548 = vmatpush1.bf16.msra.mxu0 0
    %549 = vmatprep.subr.bf16.mxu0 0
    %550 = vmatpush1.bf16.msra.mxu0 0
    %551 = vmatprep.subr.bf16.mxu0 0
    %552 = vmatpush1.bf16.msra.mxu0 0
    %553 = vmatprep.subr.bf16.mxu0 0
    %554 = vmatpush1.bf16.msra.mxu0 0
    %555 = vmatprep.subr.bf16.mxu0 0
    %556 = vmatpush1.bf16.msra.mxu0 0
    %557 = vmatprep.subr.bf16.mxu0 0
    %558 = vmatpush1.bf16.msra.mxu0 0
    %559 = vmatprep.subr.bf16.mxu0 0
    %560 = vmatpush1.bf16.msra.mxu0 0
    %561 = vmatprep.subr.bf16.mxu0 0
    %562 = vmatpush1.bf16.msra.mxu0 0
    %563 = vmatprep.subr.bf16.mxu0 0
    %564 = vmatpush1.bf16.msra.mxu0 0
    %565 = vmatprep.subr.bf16.mxu0 0
    %566 = vmatpush1.bf16.msra.mxu0 0
    %567 = vmatprep.subr.bf16.mxu0 0
    %568 = vmatpush1.bf16.msra.mxu0 0
    %569 = vmatprep.subr.bf16.mxu0 0
    %570 = vmatpush1.bf16.msra.mxu0 0
    %571 = vmatprep.mubr.bf16.mxu0 0
    %572 = vmatmul.mubr.bf16.gmra.mrb[0].mxu0 %v63
    %v573 = vpop.f32.mrb[0].mxu0
    %v574 = vadd.f32 0.0, %v573
    %v575 = vpop.f32.mrb[0].mxu0
    %v576 = vadd.f32 0.0, %v575
    %v577 = vpop.f32.mrb[0].mxu0
    %v578 = vpop.f32.mrb[0].mxu0
    %579 = vdwg.mxu0
    %v580 = vmax.f32 %v116, %v255
    %v581 = vmax.f32 %v118, %v257
    %v582 = vmax.f32 %v157, %v296
    %v583 = vmax.f32 %v159, %v298
    %v584 = vmax.f32 %v394, %v533
    %v585 = vmax.f32 %v396, %v535
    %v586 = vmax.f32 %v435, %v574
    %v587 = vmax.f32 %v437, %v576
    %v588 = vmax.f32 %v580, %v584
    %v589 = vmax.f32 %v581, %v585
    %v590 = vmax.f32 %v582, %v586
    %v591 = vmax.f32 %v583, %v587
    %v592 = vld [vmem:[%s2] sm:$0x3f]
    %594 = vset.pattern.permute.xlu0 0
    %595 = vperm.xlu0 %594, %v592
    %v596 = vpop.permute.xlu0 %595
    %v598 = vadd.f32 %v588, %v596
    %v599 = vadd.f32 %v589, %v596
    %v600 = vadd.f32 %v590, %v596
    %v601 = vadd.f32 %v591, %v596
    %v602 = vmax.f32 %v598, 0.0
    %v603 = vmax.f32 %v599, 0.0
    %v604 = vmax.f32 %v600, 0.0
    %v605 = vmax.f32 %v601, 0.0
    %v606 = vpack.c.bf16 %v602, %v602
    %v607 = vpack.c.bf16 %v603, %v603
    %v608 = vpack.c.bf16 %v604, %v604
    %v609 = vpack.c.bf16 %v605, %v605
    %v614 = vunpack.c.l.b16 %v606
    %v615 = vunpack.c.l.b16 %v607
    %v616 = vunpack.c.l.b16 %v608
    %v617 = vunpack.c.l.b16 %v609
    %v618 = vpack.c.b16 %v615, %v614
    %v619 = vpack.c.b16 %v617, %v616
    %622 = vst [vmem:[#allocation2] sm:$0x77] %v618
    %vm623 = vcmask 1042432
    %vm624 = vcmask 63492
    %vm625 = vmor %vm624, %vm623
    %626 = vst.msk [vmem:[#allocation2 + $0x8] sm:$0x77] %vm625, %v619
    // Predicated region
    $region14: #{tpu_custom_call.1} parent=1 // pred_check
      _
    $region15: #{tpu_custom_call.1} parent=1 // pred_check_branch
      %628 = sbr.rel (0) target = $region17
    $region16: #{tpu_custom_call.1} parent=1 // pred_region
      %s630 = ssub.s32 256, 256
      %631 = vsyncadd [#allocation3], %s630
      %s633 = sshll.u32 [#allocation2], 4
      %s634 = int_to_ptr.vmem [resolvable:$true] %s633
      %636 = dma.vmem_to_hbm [thread:$0]  %s634, 256, %s3, [#allocation3]
    $region17: #{tpu_custom_call.1} parent=1 // pred_fallthru
      _
    // Predicated region
    $region18: #{tpu_custom_call.1} parent=1 // pred_check
      _
    $region19: #{tpu_custom_call.1} parent=1 // pred_check_branch
      %638 = sbr.rel (0) target = $region21
    $region20: #{tpu_custom_call.1} parent=1 // pred_region
      %639 = dma.done [#allocation3], 256
    $region21: #{tpu_custom_call.1} parent=1 // pred_fallthru
      _
    %640 = vsyncpa [#allocation3], 1

</llo_original>
